<compile_context>
chip_gen: v7x
topology: tpu7x:2x2x1
jax: 0.10.0
libtpu: 0.0.40
codegen_flags: <defaults>
</compile_context>

<pallas_src>
from functools import partial

import jax
import jax.numpy as jnp
from jax.experimental import pallas as pl
from jax.experimental.pallas import tpu as pltpu


def _round_up(n, m):
    return ((n + m - 1) // m) * m


def policy_net_kernel(x_ref, w1_ref, b1_ref, w2_ref, b2_ref, o_ref):
    # x_ref:  (bm, state_dim)     f32   (tiled over batch)
    # w1_ref: (state_dim, hidden) f32   (resident: index_map -> (0, 0))
    # b1_ref: (1, hidden)         f32
    # w2_ref: (hidden, n_pad)     f32   (columns >= action_dim are zero)
    # b2_ref: (1, n_pad)          f32   (columns >= action_dim are -1e30)
    # o_ref:  (bm, n_pad)         f32   (lane-dense 128-wide output slab)
    x = x_ref[...]
    state_dim = x.shape[1]

    # fc1 + ReLU.  K = state_dim = 4, so a 4-term VPU broadcast-FMA beats an
    # MXU round-trip; acc broadcasts (1, hidden) -> (bm, hidden).
    acc = b1_ref[...]
    for k in range(state_dim):                        # static unroll (K = 4)
        acc = acc + x[:, k:k + 1] * w1_ref[k:k + 1, :]
    h = jnp.maximum(acc, 0.0)

    # fc2 on the MXU with f32 accumulate.  n_pad = 128 makes this a proper
    # 128-column MXU tile and makes the output store lane-dense.
    logits = jnp.dot(h, w2_ref[...], preferred_element_type=jnp.float32)
    logits = logits + b2_ref[...]

    # Numerically stable softmax over the last (lane) axis.  Padded columns
    # carry zero weights and a -1e30 bias, so exp(...) == 0 exactly and the
    # real action probabilities are untouched.  Exact division (NOT the
    # approximate EUP reciprocal) so rows sum to 1 to f32 precision.
    m = jnp.max(logits, axis=-1, keepdims=True)
    e = jnp.exp(logits - m)
    s = jnp.sum(e, axis=-1, keepdims=True)
    o_ref[...] = (e / s).astype(o_ref.dtype)


def prepare_policy_net_params(w1, b1, w2, b2):
    """One-time conversion from PyTorch nn.Linear layout to kernel layout.

    w1: (hidden, state_dim), b1: (hidden,), w2: (action_dim, hidden),
    b2: (action_dim,).

    Returns (w1_t, b1_2d, w2_pad, b2_pad) where the fc2 output dimension is
    zero-padded to a multiple of 128 lanes (bias padded with -1e30, a large
    *finite* negative so the max-subtraction path never sees inf-inf) so the
    kernel's logits / softmax / output store are lane-dense.  Call once at
    init; keeps transposes / reshapes / padding off the per-step hot path.
    """
    w1_t = jnp.asarray(w1, jnp.float32).T                        # (S, H)
    b1_2d = jnp.asarray(b1, jnp.float32).reshape(1, -1)          # (1, H)
    w2_t = jnp.asarray(w2, jnp.float32).T                        # (H, A)
    b2_2d = jnp.asarray(b2, jnp.float32).reshape(1, -1)          # (1, A)
    action_dim = w2_t.shape[1]
    n_pad = _round_up(max(action_dim, 128), 128)
    w2_p = jnp.pad(w2_t, ((0, 0), (0, n_pad - action_dim)))      # zeros
    b2_p = jnp.pad(b2_2d, ((0, 0), (0, n_pad - action_dim)),
                   constant_values=-1e30)                        # -> prob 0
    return w1_t, b1_2d, w2_p, b2_p


@partial(jax.jit, static_argnames=("action_dim", "bm", "num_cores"))
def policy_net_forward(x, params, action_dim, bm=8192, num_cores=1):
    """x: (B, state_dim) f32; params from prepare_policy_net_params().

    action_dim: true number of actions (static); padded softmax columns are
        sliced off before returning.
    bm: max batch-tile rows.  Default 8192 collapses the grid to one step for
        typical RL batches (the kernel is per-grid-step-overhead bound, not
        FLOP/HBM bound; total resident data ~130 KB, trivially in VMEM on
        v5e/v6e (128 MiB) and v7x (64 MiB)).
    num_cores: pass 2 on v7x for large batches so the ("parallel",) grid axis
        is split into >= 2 even-sized steps and both TensorCores are fed.
    """
    w1_t, b1_2d, w2_p, b2_p = params
    B, state_dim = x.shape
    hidden = w1_t.shape[1]
    n_pad = w2_p.shape[1]

    # Batch tile: always a multiple of 8 (sublane constraint), as large as
    # possible -> grid=(1,) on v5e/v6e whenever the batch fits one tile.
    bm_eff = min(bm, _round_up(max(B, 1), 8))
    if num_cores > 1 and B >= 16 * num_cores:
        # v7x: give the parallel grid axis >= num_cores even-sized steps.
        bm_eff = min(bm_eff, _round_up(pl.cdiv(_round_up(B, 8), num_cores), 8))
    bm_eff = _round_up(bm_eff, 8)
    b_pad = _round_up(B, bm_eff)
    x_p = x if b_pad == B else jnp.pad(x, ((0, b_pad - B), (0, 0)))

    grid = (b_pad // bm_eff,)
    flops = 2 * b_pad * hidden * (state_dim + n_pad) + 6 * b_pad * n_pad
    transcendentals = b_pad * n_pad                     # exp
    bytes_accessed = 4 * (x_p.size + w1_t.size + b1_2d.size
                          + w2_p.size + b2_p.size + b_pad * n_pad)

    # NOTE: the four weight/bias operands have constant index_map (0, 0) and
    # could be marked pipeline_mode=pl.Buffered(1) to drop their second
    # buffer; at ~130 KB total the saving is negligible, so the default
    # buffering is kept for maximum lowering compatibility.
    out = pl.pallas_call(
        policy_net_kernel,
        out_shape=jax.ShapeDtypeStruct((b_pad, n_pad), jnp.float32),
        grid=grid,
        in_specs=[
            pl.BlockSpec((bm_eff, state_dim), lambda i: (i, 0)),   # x tiles
            pl.BlockSpec((state_dim, hidden), lambda i: (0, 0)),   # resident
            pl.BlockSpec((1, hidden), lambda i: (0, 0)),           # resident
            pl.BlockSpec((hidden, n_pad), lambda i: (0, 0)),       # resident
            pl.BlockSpec((1, n_pad), lambda i: (0, 0)),            # resident
        ],
        out_specs=pl.BlockSpec((bm_eff, n_pad), lambda i: (i, 0)),
        compiler_params=pltpu.CompilerParams(
            dimension_semantics=("parallel",)),   # shards steps across TCs (v7x)
        cost_estimate=pl.CostEstimate(
            flops=flops, transcendentals=transcendentals,
            bytes_accessed=bytes_accessed),
    )(x_p, w1_t, b1_2d, w2_p, b2_p)

    # TODO(synk): for per-env-step RL inference (B ~ 1-8), fuse the critic
    # (ValueNet) and categorical sampling into this same pallas_call (or batch
    # environments) -- dispatch overhead dominates at that size.
    return out[:B, :action_dim]


def _init_params(key, state_dim, hidden_dim, action_dim):
    """Deterministic init matching PyTorch nn.Linear parameter shapes."""
    k1, k2, k3, k4 = jax.random.split(key, 4)
    lim1 = 1.0 / jnp.sqrt(state_dim)
    lim2 = 1.0 / jnp.sqrt(hidden_dim)
    w1 = jax.random.uniform(k1, (hidden_dim, state_dim), jnp.float32, -lim1, lim1)
    b1 = jax.random.uniform(k2, (hidden_dim,), jnp.float32, -lim1, lim1)
    w2 = jax.random.uniform(k3, (action_dim, hidden_dim), jnp.float32, -lim2, lim2)
    b2 = jax.random.uniform(k4, (action_dim,), jnp.float32, -lim2, lim2)
    return w1, b1, w2, b2


def _ref_forward(x, w1, b1, w2, b2):
    h = jnp.maximum(x @ w1.T + b1, 0.0)
    return jax.nn.softmax(h @ w2.T + b2, axis=1)


if __name__ == "__main__":
    # CartPole-v0: state_dim=4, action_dim=2; hidden_dim=128 per the module.
    state_dim, hidden_dim, action_dim = 4, 128, 2

    key = jax.random.PRNGKey(0)
    kx1, kx2, kp = jax.random.split(key, 3)
    w1, b1, w2, b2 = _init_params(kp, state_dim, hidden_dim, action_dim)
    params = prepare_policy_net_params(w1, b1, w2, b2)   # hoisted, done once

    ok = True

    # 1) Tiny single-step batch (RL inner-loop shape) -> grid=(1,).
    x_small = jax.random.normal(kx1, (2, state_dim), jnp.float32)
    out_small = jax.block_until_ready(
        policy_net_forward(x_small, params, action_dim))
    ref_small = _ref_forward(x_small, w1, b1, w2, b2)
    ok &= out_small.shape == (2, action_dim)
    ok &= bool(jnp.allclose(out_small, ref_small, atol=1e-4, rtol=1e-4))
    ok &= bool(jnp.allclose(jnp.sum(out_small, axis=1), 1.0, atol=1e-4))

    # 2) Batched evaluation with the default (large) tile -> grid=(1,).
    x_big = jax.random.normal(kx2, (200, state_dim), jnp.float32)
    out_big = jax.block_until_ready(
        policy_net_forward(x_big, params, action_dim))
    ref_big = _ref_forward(x_big, w1, b1, w2, b2)
    ok &= out_big.shape == (200, action_dim)
    ok &= bool(jnp.allclose(out_big, ref_big, atol=1e-4, rtol=1e-4))
    ok &= bool(jnp.allclose(jnp.sum(out_big, axis=1), 1.0, atol=1e-4))

    # 3) Multi-step grid (exercises batch padding, resident-weight BlockSpecs,
    #    the parallel axis and the v7x two-core split heuristic).
    out_split = jax.block_until_ready(
        policy_net_forward(x_big, params, action_dim, bm=64, num_cores=2))
    ok &= out_split.shape == (200, action_dim)
    ok &= bool(jnp.allclose(out_split, ref_big, atol=1e-4, rtol=1e-4))

    assert ok
    print("KERNEL_OK")
</pallas_src>

<mosaic_0001>
module attributes {stable_mosaic.version = 11 : i64} {
  func.func @policy_net_kernel(%arg0: i32, %arg1: memref<8x4xf32, #tpu.memory_space<vmem>>, %arg2: memref<4x128xf32, #tpu.memory_space<vmem>>, %arg3: memref<1x128xf32, #tpu.memory_space<vmem>>, %arg4: memref<128x128xf32, #tpu.memory_space<vmem>>, %arg5: memref<1x128xf32, #tpu.memory_space<vmem>>, %arg6: memref<8x128xf32, #tpu.memory_space<vmem>>) attributes {dimension_semantics = [#tpu.dimension_semantics<parallel>], iteration_bounds = array<i64: 1>, scalar_prefetch = 0 : i64, scratch_operands = 0 : i64, tpu.core_type = #tpu.core_type<tc>, window_params = [{transform_indices = @transform_0, window_bounds = array<i64: 8, 4>}, {pipeline_mode = #tpu.pipeline_mode<synchronous>, transform_indices = @transform_1, window_bounds = array<i64: 4, 128>}, {pipeline_mode = #tpu.pipeline_mode<synchronous>, transform_indices = @transform_2, window_bounds = array<i64: 1, 128>}, {pipeline_mode = #tpu.pipeline_mode<synchronous>, transform_indices = @transform_3, window_bounds = array<i64: 128, 128>}, {pipeline_mode = #tpu.pipeline_mode<synchronous>, transform_indices = @transform_4, window_bounds = array<i64: 1, 128>}, {transform_indices = @transform_5, window_bounds = array<i64: 8, 128>}]} {
    %c0 = arith.constant 0 : index
    %c0_0 = arith.constant 0 : index
    %0 = vector.load %arg1[%c0, %c0_0] : memref<8x4xf32, #tpu.memory_space<vmem>>, vector<8x4xf32>
    %c0_1 = arith.constant 0 : index
    %c0_2 = arith.constant 0 : index
    %1 = vector.load %arg3[%c0_1, %c0_2] : memref<1x128xf32, #tpu.memory_space<vmem>>, vector<1x128xf32>
    %2 = vector.extract_strided_slice %0 {offsets = [0, 0], sizes = [8, 1], strides = [1, 1]} : vector<8x4xf32> to vector<8x1xf32>
    %c0_3 = arith.constant 0 : index
    %c0_4 = arith.constant 0 : index
    %3 = vector.load %arg2[%c0_3, %c0_4] : memref<4x128xf32, #tpu.memory_space<vmem>>, vector<1x128xf32>
    %4 = vector.broadcast %2 : vector<8x1xf32> to vector<8x128xf32>
    %5 = vector.broadcast %3 : vector<1x128xf32> to vector<8x128xf32>
    %6 = arith.mulf %4, %5 : vector<8x128xf32>
    %7 = vector.broadcast %1 : vector<1x128xf32> to vector<8x128xf32>
    %8 = arith.addf %7, %6 : vector<8x128xf32>
    %9 = vector.extract_strided_slice %0 {offsets = [0, 1], sizes = [8, 1], strides = [1, 1]} : vector<8x4xf32> to vector<8x1xf32>
    %c1 = arith.constant 1 : index
    %c0_5 = arith.constant 0 : index
    %10 = vector.load %arg2[%c1, %c0_5] : memref<4x128xf32, #tpu.memory_space<vmem>>, vector<1x128xf32>
    %11 = vector.broadcast %9 : vector<8x1xf32> to vector<8x128xf32>
    %12 = vector.broadcast %10 : vector<1x128xf32> to vector<8x128xf32>
    %13 = arith.mulf %11, %12 : vector<8x128xf32>
    %14 = arith.addf %8, %13 : vector<8x128xf32>
    %15 = vector.extract_strided_slice %0 {offsets = [0, 2], sizes = [8, 1], strides = [1, 1]} : vector<8x4xf32> to vector<8x1xf32>
    %c2 = arith.constant 2 : index
    %c0_6 = arith.constant 0 : index
    %16 = vector.load %arg2[%c2, %c0_6] : memref<4x128xf32, #tpu.memory_space<vmem>>, vector<1x128xf32>
    %17 = vector.broadcast %15 : vector<8x1xf32> to vector<8x128xf32>
    %18 = vector.broadcast %16 : vector<1x128xf32> to vector<8x128xf32>
    %19 = arith.mulf %17, %18 : vector<8x128xf32>
    %20 = arith.addf %14, %19 : vector<8x128xf32>
    %21 = vector.extract_strided_slice %0 {offsets = [0, 3], sizes = [8, 1], strides = [1, 1]} : vector<8x4xf32> to vector<8x1xf32>
    %c3 = arith.constant 3 : index
    %c0_7 = arith.constant 0 : index
    %22 = vector.load %arg2[%c3, %c0_7] : memref<4x128xf32, #tpu.memory_space<vmem>>, vector<1x128xf32>
    %23 = vector.broadcast %21 : vector<8x1xf32> to vector<8x128xf32>
    %24 = vector.broadcast %22 : vector<1x128xf32> to vector<8x128xf32>
    %25 = arith.mulf %23, %24 : vector<8x128xf32>
    %26 = arith.addf %20, %25 : vector<8x128xf32>
    %cst = arith.constant 0.000000e+00 : f32
    %27 = vector.broadcast %cst : f32 to vector<8x128xf32>
    %28 = arith.maximumf %26, %27 : vector<8x128xf32>
    %c0_8 = arith.constant 0 : index
    %c0_9 = arith.constant 0 : index
    %29 = vector.load %arg4[%c0_8, %c0_9] : memref<128x128xf32, #tpu.memory_space<vmem>>, vector<128x128xf32>
    %cst_10 = arith.constant dense<0.000000e+00> : vector<8x128xf32>
    %30 = tpu.matmul %28, %29, %cst_10 {dimension_numbers = #tpu.dot_dimension_numbers<[1], [0], [0], [1], [0, 0, 1, 1], [], []>} : vector<8x128xf32>, vector<128x128xf32>, vector<8x128xf32> -> vector<8x128xf32>
    %c0_11 = arith.constant 0 : index
    %c0_12 = arith.constant 0 : index
    %31 = vector.load %arg5[%c0_11, %c0_12] : memref<1x128xf32, #tpu.memory_space<vmem>>, vector<1x128xf32>
    %32 = vector.broadcast %31 : vector<1x128xf32> to vector<8x128xf32>
    %33 = arith.addf %30, %32 : vector<8x128xf32>
    %cst_13 = arith.constant dense<0xFF800000> : vector<8xf32>
    %34 = vector.multi_reduction <maximumf>, %33, %cst_13 [1] : vector<8x128xf32> to vector<8xf32>
    %35 = vector.shape_cast %34 : vector<8xf32> to vector<8x1xf32>
    %36 = vector.broadcast %35 : vector<8x1xf32> to vector<8x128xf32>
    %37 = arith.subf %33, %36 : vector<8x128xf32>
    %38 = math.exp %37 : vector<8x128xf32>
    %cst_14 = arith.constant dense<0.000000e+00> : vector<8xf32>
    %39 = vector.multi_reduction <add>, %38, %cst_14 [1] : vector<8x128xf32> to vector<8xf32>
    %40 = vector.shape_cast %39 : vector<8xf32> to vector<8x1xf32>
    %41 = vector.broadcast %40 : vector<8x1xf32> to vector<8x128xf32>
    %42 = arith.divf %38, %41 : vector<8x128xf32>
    %c0_15 = arith.constant 0 : index
    %c0_16 = arith.constant 0 : index
    %43 = vector.load %arg6[%c0_15, %c0_16] : memref<8x128xf32, #tpu.memory_space<vmem>>, vector<8x128xf32>
    tpu.vector_store %arg6[%c0_15, %c0_16], %42 {strides = array<i32>} : memref<8x128xf32, #tpu.memory_space<vmem>>, vector<8x128xf32>,
    return
  }
  func.func @transform_0(%arg0: i32) -> (i32, i32) {
    %c0_i32 = arith.constant 0 : i32
    %c0_i32_0 = arith.constant 0 : i32
    return %arg0, %c0_i32 : i32, i32
  }
  func.func @transform_1(%arg0: i32) -> (i32, i32) {
    %c0_i32 = arith.constant 0 : i32
    %c0_i32_0 = arith.constant 0 : i32
    %c0_i32_1 = arith.constant 0 : i32
    return %c0_i32, %c0_i32_0 : i32, i32
  }
  func.func @transform_2(%arg0: i32) -> (i32, i32) {
    %c0_i32 = arith.constant 0 : i32
    %c0_i32_0 = arith.constant 0 : i32
    %c0_i32_1 = arith.constant 0 : i32
    return %c0_i32, %c0_i32_0 : i32, i32
  }
  func.func @transform_3(%arg0: i32) -> (i32, i32) {
    %c0_i32 = arith.constant 0 : i32
    %c0_i32_0 = arith.constant 0 : i32
    %c0_i32_1 = arith.constant 0 : i32
    return %c0_i32, %c0_i32_0 : i32, i32
  }
  func.func @transform_4(%arg0: i32) -> (i32, i32) {
    %c0_i32 = arith.constant 0 : i32
    %c0_i32_0 = arith.constant 0 : i32
    %c0_i32_1 = arith.constant 0 : i32
    return %c0_i32, %c0_i32_0 : i32, i32
  }
  func.func @transform_5(%arg0: i32) -> (i32, i32) {
    %c0_i32 = arith.constant 0 : i32
    %c0_i32_0 = arith.constant 0 : i32
    return %arg0, %c0_i32 : i32, i32
  }
}

</mosaic_0001>

<llo_original>
// kernel: policy_net_forward.1
$region0: #{policy_net_forward.1}
  #allocation0 [shape = 'u32[]', space=smem, size = 0x4, offset = 0x4, fixed_abs, tag = 'smem constant byte address 0x4 - core index']
  #allocation1 [shape = 'u32[144,128]{1,0:T(1,128)}', space=vmem, size = 0x12000, scoped, tag = 'internal scratch']
  %s0 = inlined_call_operand.vmem [shape: f32[8,4], index: 0, kind: input, shape index: {}]
  %s1 = inlined_call_operand.vmem [shape: f32[4,128], index: 1, kind: input, shape index: {}]
  %s2 = inlined_call_operand.vmem [shape: f32[1,128], index: 2, kind: input, shape index: {}]
  %s3 = inlined_call_operand.hbm [shape: f32[128,128], index: 3, kind: input, shape index: {}]
  %s4 = inlined_call_operand.vmem [shape: f32[1,128], index: 4, kind: input, shape index: {}]
  %s5 = inlined_call_operand.vmem [shape: f32[8,128], index: 5, kind: output, shape index: {}]
  %s6 = sld [smem:[#allocation0]]
  $region34: #{policy_net_forward.1} parent=0
    _
  %s8 = ssub.s32 1, %s6
  %s9 = scalar_select 0, %s8, %s6
  $region1: #{policy_net_forward.1} parent=0
    #allocation2 [shape = 'u8[65536]{0}', space=vmem, size = 0x10000, scoped, tag = 'input window, operand 3, single buffered']
    #allocation3 [shape = 's32[1]{0}', space=sflag, size = 0x4, scoped, tag = 'scoped memory for policy_net_forward.1']
    %10 = vsyncpa [#allocation3], 0
    // Predicated region
    $region2: #{policy_net_forward.1} parent=1 // pred_check
      _
    $region3: #{policy_net_forward.1} parent=1 // pred_check_branch
      %12 = sbr.rel (0) target = $region5
    $region4: #{policy_net_forward.1} parent=1 // pred_region
      _
    $region5: #{policy_net_forward.1} parent=1 // pred_fallthru
      _
    // Predicated region
    $region6: #{policy_net_forward.1} parent=1 // pred_check
      _
    $region7: #{policy_net_forward.1} parent=1 // pred_check_branch
      %14 = sbr.rel (0) target = $region9
    $region8: #{policy_net_forward.1} parent=1 // pred_region
      _
    $region9: #{policy_net_forward.1} parent=1 // pred_fallthru
      _
    // Predicated region
    $region10: #{policy_net_forward.1} parent=1 // pred_check
      _
    $region11: #{policy_net_forward.1} parent=1 // pred_check_branch
      %16 = sbr.rel (0) target = $region13
    $region12: #{policy_net_forward.1} parent=1 // pred_region
      _
    $region13: #{policy_net_forward.1} parent=1 // pred_fallthru
      _
    // Predicated region
    $region14: #{policy_net_forward.1} parent=1 // pred_check
      _
    $region15: #{policy_net_forward.1} parent=1 // pred_check_branch
      %18 = sbr.rel (0) target = $region17
    $region16: #{policy_net_forward.1} parent=1 // pred_region
      %s20 = ssub.s32 2048, 2048
      %21 = vsyncadd [#allocation3], %s20
      %s22 = sshll.u32 [#allocation2], 4
      %s23 = int_to_ptr.vmem [resolvable:$true] %s22
      %28 = dma.hbm_to_vmem [thread:$0]  %s3, 2048, %s23, [#allocation3], 128, 128, 8
    $region17: #{policy_net_forward.1} parent=1 // pred_fallthru
      _
    // Predicated region
    $region18: #{policy_net_forward.1} parent=1 // pred_check
      _
    $region19: #{policy_net_forward.1} parent=1 // pred_check_branch
      %30 = sbr.rel (0) target = $region21
    $region20: #{policy_net_forward.1} parent=1 // pred_region
      _
    $region21: #{policy_net_forward.1} parent=1 // pred_fallthru
      _
    // Predicated region
    $region22: #{policy_net_forward.1} parent=1 // pred_check
      _
    $region23: #{policy_net_forward.1} parent=1 // pred_check_branch
      %32 = sbr.rel (0) target = $region25
    $region24: #{policy_net_forward.1} parent=1 // pred_region
      %33 = dma.done [#allocation3], 2048
    $region25: #{policy_net_forward.1} parent=1 // pred_fallthru
      _
    %v34 = vld [vmem:[%s0] sm:$0xff]
    %v35 = vld [vmem:[%s2] sm:$0x1]
    %v36 = vld [vmem:[%s1] sm:$0x1]
    %38 = vset.pattern.permute.xlu0 0
    %39 = vperm.xlu0 %38, %v34
    %v40 = vpop.permute.xlu0 %39
    %v42 = vlaneseq
    %v43 = vshrl.u32 %v42, 7
    %v44 = vsub.s32 0, %v43
    %v45 = vrot.slane %v36, %v44
    %v46 = vmul.f32 %v40, %v45
    %v48 = vlaneseq
    %v49 = vshrl.u32 %v48, 7
    %v50 = vsub.s32 0, %v49
    %v51 = vrot.slane %v35, %v50
    %v53 = vadd.f32 %v51, %v46
    %v54 = vld [vmem:[%s1 + $0x1] sm:$0x1]
    %55 = vset.pattern.permute.xlu0 1
    %56 = vperm.xlu0 %55, %v34
    %v57 = vpop.permute.xlu0 %56
    %v59 = vlaneseq
    %v60 = vshrl.u32 %v59, 7
    %v61 = vsub.s32 0, %v60
    %v62 = vrot.slane %v54, %v61
    %v63 = vmul.f32 %v57, %v62
    %v64 = vadd.f32 %v53, %v63
    %v65 = vld [vmem:[%s1 + $0x2] sm:$0x1]
    %66 = vset.pattern.permute.xlu0 2
    %67 = vperm.xlu0 %66, %v34
    %v68 = vpop.permute.xlu0 %67
    %v70 = vlaneseq
    %v71 = vshrl.u32 %v70, 7
    %v72 = vsub.s32 0, %v71
    %v73 = vrot.slane %v65, %v72
    %v74 = vmul.f32 %v68, %v73
    %v75 = vadd.f32 %v64, %v74
    %v76 = vld [vmem:[%s1 + $0x3] sm:$0x1]
    %77 = vset.pattern.permute.xlu0 3
    %78 = vperm.xlu0 %77, %v34
    %v79 = vpop.permute.xlu0 %78
    %v81 = vlaneseq
    %v82 = vshrl.u32 %v81, 7
    %v83 = vsub.s32 0, %v82
    %v84 = vrot.slane %v76, %v83
    %v85 = vmul.f32 %v79, %v84
    %v86 = vadd.f32 %v75, %v85
    %v87 = vmax.f32 %v86, 0.0
    %v88 = vld [vmem:[#allocation2] sm:$0xff]
    %v89 = vld [vmem:[#allocation2 + $0x8] sm:$0xff]
    %v90 = vld [vmem:[#allocation2 + $0x10] sm:$0xff]
    %v91 = vld [vmem:[#allocation2 + $0x18] sm:$0xff]
    %v92 = vld [vmem:[#allocation2 + $0x20] sm:$0xff]
    %v93 = vld [vmem:[#allocation2 + $0x28] sm:$0xff]
    %v94 = vld [vmem:[#allocation2 + $0x30] sm:$0xff]
    %v95 = vld [vmem:[#allocation2 + $0x38] sm:$0xff]
    %v96 = vld [vmem:[#allocation2 + $0x40] sm:$0xff]
    %v97 = vld [vmem:[#allocation2 + $0x48] sm:$0xff]
    %v98 = vld [vmem:[#allocation2 + $0x50] sm:$0xff]
    %v99 = vld [vmem:[#allocation2 + $0x58] sm:$0xff]
    %v100 = vld [vmem:[#allocation2 + $0x60] sm:$0xff]
    %v101 = vld [vmem:[#allocation2 + $0x68] sm:$0xff]
    %v102 = vld [vmem:[#allocation2 + $0x70] sm:$0xff]
    %v103 = vld [vmem:[#allocation2 + $0x78] sm:$0xff]
    %v104 = vld [vmem:[%s4] sm:$0x1]
    %v106 = vlaneseq
    %v107 = vshrl.u32 %v106, 7
    %v108 = vsub.s32 0, %v107
    %v109 = vrot.slane %v104, %v108
    %111 = vmatprep.subr.mxu0 0.0
    %112 = vmatpush1.msra.mxu0 %v88
    %113 = vmatprep.subr.mxu0 0.0
    %114 = vmatpush1.msra.mxu0 %v89
    %115 = vmatprep.subr.mxu0 0.0
    %116 = vmatpush1.msra.mxu0 %v90
    %117 = vmatprep.subr.mxu0 0.0
    %118 = vmatpush1.msra.mxu0 %v91
    %119 = vmatprep.subr.mxu0 0.0
    %120 = vmatpush1.msra.mxu0 %v92
    %121 = vmatprep.subr.mxu0 0.0
    %122 = vmatpush1.msra.mxu0 %v93
    %123 = vmatprep.subr.mxu0 0.0
    %124 = vmatpush1.msra.mxu0 %v94
    %125 = vmatprep.subr.mxu0 0.0
    %126 = vmatpush1.msra.mxu0 %v95
    %127 = vmatprep.subr.mxu0 0.0
    %128 = vmatpush1.msra.mxu0 %v96
    %129 = vmatprep.subr.mxu0 0.0
    %130 = vmatpush1.msra.mxu0 %v97
    %131 = vmatprep.subr.mxu0 0.0
    %132 = vmatpush1.msra.mxu0 %v98
    %133 = vmatprep.subr.mxu0 0.0
    %134 = vmatpush1.msra.mxu0 %v99
    %135 = vmatprep.subr.mxu0 0.0
    %136 = vmatpush1.msra.mxu0 %v100
    %137 = vmatprep.subr.mxu0 0.0
    %138 = vmatpush1.msra.mxu0 %v101
    %139 = vmatprep.subr.mxu0 0.0
    %140 = vmatpush1.msra.mxu0 %v102
    %141 = vmatprep.subr.mxu0 0.0
    %142 = vmatpush1.msra.mxu0 %v103
    %143 = vmatprep.subr.mxu0 0.0
    %144 = vmatpush1.msra.mxu0 0.0
    %145 = vmatprep.subr.mxu0 0.0
    %146 = vmatpush1.msra.mxu0 0.0
    %147 = vmatprep.subr.mxu0 0.0
    %148 = vmatpush1.msra.mxu0 0.0
    %149 = vmatprep.subr.mxu0 0.0
    %150 = vmatpush1.msra.mxu0 0.0
    %151 = vmatprep.subr.mxu0 0.0
    %152 = vmatpush1.msra.mxu0 0.0
    %153 = vmatprep.subr.mxu0 0.0
    %154 = vmatpush1.msra.mxu0 0.0
    %155 = vmatprep.subr.mxu0 0.0
    %156 = vmatpush1.msra.mxu0 0.0
    %157 = vmatprep.subr.mxu0 0.0
    %158 = vmatpush1.msra.mxu0 0.0
    %159 = vmatprep.subr.mxu0 0.0
    %160 = vmatpush1.msra.mxu0 0.0
    %161 = vmatprep.subr.mxu0 0.0
    %162 = vmatpush1.msra.mxu0 0.0
    %163 = vmatprep.subr.mxu0 0.0
    %164 = vmatpush1.msra.mxu0 0.0
    %165 = vmatprep.subr.mxu0 0.0
    %166 = vmatpush1.msra.mxu0 0.0
    %167 = vmatprep.subr.mxu0 0.0
    %168 = vmatpush1.msra.mxu0 0.0
    %169 = vmatprep.subr.mxu0 0.0
    %170 = vmatpush1.msra.mxu0 0.0
    %171 = vmatprep.subr.mxu0 0.0
    %172 = vmatpush1.msra.mxu0 0.0
    %173 = vmatprep.subr.mxu0 0.0
    %174 = vmatpush1.msra.mxu0 0.0
    %175 = vmatprep.mubr.f32.mxu0 0.0
    %176 = vmatmul.mubr.f32.gmra.mrb[0].mxu0 %v87
    %v177 = vpop.f32.mrb[0].mxu0
    %v178 = vadd.f32 %v109, %v177
    %v179 = vpop.f32.mrb[0].mxu0
    %180 = vdwg.mxu0
    %181 = vmax.xlane.f32.xlu0 %v178
    %v182 = vpop.xlane.xlu0 %181
    %v183 = vsub.f32 %v178, %v182
    %v184 = vmul.f32 %v183, 1.442695
    %v185 = vpow.pop %v184
    %186 = vadd.xlane.f32.xlu0 %v185
    %v187 = vpop.xlane.xlu0 %186
    %v188 = vrcp.pop %v187
    %v189 = vmul.f32 %v185, %v188
    %190 = vst [vmem:[%s5] sm:$0xff] %v189
    // Predicated region
    $region26: #{policy_net_forward.1} parent=1 // pred_check
      _
    $region27: #{policy_net_forward.1} parent=1 // pred_check_branch
      %192 = sbr.rel (0) target = $region29
    $region28: #{policy_net_forward.1} parent=1 // pred_region
      _
    $region29: #{policy_net_forward.1} parent=1 // pred_fallthru
      _
    // Predicated region
    $region30: #{policy_net_forward.1} parent=1 // pred_check
      _
    $region31: #{policy_net_forward.1} parent=1 // pred_check_branch
      %194 = sbr.rel (0) target = $region33
    $region32: #{policy_net_forward.1} parent=1 // pred_region
      _
    $region33: #{policy_net_forward.1} parent=1 // pred_fallthru
      _
    %195 = vsyncpa [#allocation3], 1

</llo_original>
